<compile_context>
chip_gen: v7x
topology: tpu7x:2x2x1
jax: 0.10.0
libtpu: 0.0.40
codegen_flags: <defaults>
</compile_context>

<pallas_src>
import math

import jax
import jax.numpy as jnp
from jax import lax
from jax.experimental import pallas as pl
from jax.experimental.pallas import tpu as pltpu

_MiB = 1024 * 1024


# ----------------------------------------------------------------------------
# Tiling helpers
# ----------------------------------------------------------------------------

def _pick_tile(dim, max_tile, quantum=128):
    """Largest legal tile <= max_tile: either the full `dim` (always legal) or a
    multiple of `quantum` dividing `dim` (Mosaic (8,128) block constraint).
    Fails loudly instead of silently returning the full dimension."""
    if dim <= max_tile:
        return dim
    t = (max_tile // quantum) * quantum
    while t >= quantum:
        if dim % t == 0:
            return t
        t -= quantum
    raise ValueError(
        f"no {quantum}-multiple tile <= {max_tile} divides dim={dim}; "
        f"pad the feature dimension to a multiple of {quantum}")


def _vmem_estimate(B, L, th_act, th_red, to, isz_act, isz_w):
    """Rough double-buffered working set (bytes); the larger of the two kernels governs."""
    kern_a = (2 * B * L * isz_act             # x (resident block, double-buffered)
              + 2 * L * th_act * isz_w        # w1 tiles
              + 3 * 2 * 8 * th_act * 4        # b1/gamma/beta tiles (8-sublane padded)
              + 2 * B * th_act * isz_act      # g output tiles
              + 2 * B * th_act * 4)           # f32 elementwise intermediates
    kern_b = (2 * B * th_red * isz_act        # g tiles
              + 2 * th_red * to * isz_w       # w2 tiles
              + 2 * 8 * to * 4                # b2 tiles
              + 2 * B * to * 4)               # f32 output / accumulator tiles
    return max(kern_a, kern_b)


def _choose_tiles(B, L, H, O, isz_act, isz_w, budget_bytes, max_tile=512):
    """Generation-aware tiles: biggest that fit the VMEM budget (v7x: 64 MiB/TC).
    Kernel A's H tiles and the O tiles stay >= 2 blocks when possible so the
    'parallel' grid axes can shard across v7x's two TensorCores; kernel B's
    reduction tile (th_red) is kept as large as possible (fewer o_ref RMW passes)."""
    th_act = th_red = to = None
    for cap in range(max_tile, 127, -128):
        th_red = _pick_tile(H, cap)
        th_act = _pick_tile(H, min(cap, max(H // 2, 128))) if H >= 256 else _pick_tile(H, cap)
        to = _pick_tile(O, min(cap, max(O // 2, 128))) if O >= 256 else _pick_tile(O, cap)
        if _vmem_estimate(B, L, th_act, th_red, to, isz_act, isz_w) <= budget_bytes:
            return th_act, th_red, to
    return th_act, th_red, to  # smallest candidate; compiler may spill for extreme shapes


# ----------------------------------------------------------------------------
# Kernel A: hidden activations g = GELU(BN(x @ w1 + b1)), computed once per H tile
# ----------------------------------------------------------------------------

def _hidden_kernel(x_ref, w1_ref, b1_ref, gamma_ref, beta_ref, g_ref):
    # Linear 1 on this hidden-feature tile: (B, L) @ (L, th) + b1
    h = jnp.dot(x_ref[...], w1_ref[...], preferred_element_type=jnp.float32) + b1_ref[...]

    # BatchNorm1d training-mode stats (biased variance, eps=1e-5, like PyTorch).
    # Stats reduce over the batch axis only, so tiling H is numerically exact.
    mean = jnp.mean(h, axis=0, keepdims=True)
    var = jnp.mean((h - mean) * (h - mean), axis=0, keepdims=True)
    hn = (h - mean) * lax.rsqrt(var + 1e-5) * gamma_ref[...] + beta_ref[...]

    # Exact-erf GELU (matches nn.GELU() default).
    g = 0.5 * hn * (1.0 + lax.erf(hn * (1.0 / math.sqrt(2.0))))
    g_ref[...] = g.astype(g_ref.dtype)


# ----------------------------------------------------------------------------
# Kernel B: out = tanh(g @ w2 + b2), w2 streamed, accumulate directly in o_ref
# ----------------------------------------------------------------------------

def _output_kernel(g_ref, w2_ref, b2_ref, o_ref):
    k = pl.program_id(1)  # H-tile (reduction) index

    @pl.when(k == 0)
    def _():
        o_ref[...] = jnp.zeros_like(o_ref)

    # Output block index (0, j) is constant over k, and the output is already f32,
    # so accumulate in place — no separate VMEM scratch.
    o_ref[...] += jnp.dot(g_ref[...], w2_ref[...], preferred_element_type=jnp.float32)

    @pl.when(k == pl.num_programs(1) - 1)
    def _():
        o_ref[...] = jnp.tanh(o_ref[...] + b2_ref[...])


# ----------------------------------------------------------------------------
# Wrapper
# ----------------------------------------------------------------------------

def generator_forward(x, params, out_ch, out_h, out_w, *,
                      weight_dtype=jnp.float32, vmem_budget_bytes=40 * _MiB):
    """x: (B, latent_dim). Returns (B, out_ch, out_h, out_w) float32.

    weight_dtype=jnp.bfloat16 halves weight/activation DMA and doubles MXU rate on
    v6e/v7x (f32 accumulation preserved); the default f32 path matches PyTorch exactly.
    """
    w1, b1, gamma, beta, w2, b2 = params
    B, L = x.shape
    H = w1.shape[1]
    O = w2.shape[1]
    assert O == out_ch * out_h * out_w

    isz_w = jnp.dtype(weight_dtype).itemsize
    isz_act = isz_w
    th_act, th_red, to = _choose_tiles(B, L, H, O, isz_act, isz_w, vmem_budget_bytes)
    n_ha, n_hr, n_o = H // th_act, H // th_red, O // to

    # Scoped-VMEM limit: above the 16 MiB v5e default, within v7x's 64 MiB/TC.
    vmem_limit = int(min(max(2 * _vmem_estimate(B, L, th_act, th_red, to, isz_act, isz_w),
                             32 * _MiB), 48 * _MiB))

    xc = x.astype(weight_dtype)          # cast once here, not on every grid step
    w1c = w1.astype(weight_dtype)
    w2c = w2.astype(weight_dtype)
    # 1D vectors as (1, dim) rows so they map cleanly onto (sublane, lane) tiles.
    b1_2d = b1.reshape(1, H).astype(jnp.float32)
    gamma_2d = gamma.reshape(1, H).astype(jnp.float32)
    beta_2d = beta.reshape(1, H).astype(jnp.float32)
    b2_2d = b2.reshape(1, O).astype(jnp.float32)

    # ---- Kernel A: hidden activations, each w1 tile DMA'd exactly once -------------
    cost_a = pl.CostEstimate(
        flops=2 * B * L * H + 10 * B * H,
        transcendentals=B * H,
        bytes_accessed=B * L * isz_act + L * H * isz_w + 3 * H * 4 + B * H * isz_act,
    )
    g = pl.pallas_call(
        _hidden_kernel,
        out_shape=jax.ShapeDtypeStruct((B, H), weight_dtype),
        grid_spec=pltpu.PrefetchScalarGridSpec(
            num_scalar_prefetch=0,
            grid=(n_ha,),
            in_specs=[
                pl.BlockSpec((B, L), lambda k: (0, 0)),       # x resident (BN needs full batch)
                pl.BlockSpec((L, th_act), lambda k: (0, k)),  # w1 H-tile (streamed once)
                pl.BlockSpec((1, th_act), lambda k: (0, k)),  # b1
                pl.BlockSpec((1, th_act), lambda k: (0, k)),  # gamma
                pl.BlockSpec((1, th_act), lambda k: (0, k)),  # beta
            ],
            out_specs=pl.BlockSpec((B, th_act), lambda k: (0, k)),
        ),
        compiler_params=pltpu.CompilerParams(
            dimension_semantics=("parallel",),                 # megacore-shardable on v7x
            vmem_limit_bytes=vmem_limit,
        ),
        cost_estimate=cost_a,
    )(xc, w1c, b1_2d, gamma_2d, beta_2d)

    # ---- Kernel B: Linear 2 + tanh, accumulate directly into lane-dense output ------
    cost_b = pl.CostEstimate(
        flops=2 * B * H * O,
        transcendentals=B * O,
        bytes_accessed=B * H * isz_act * n_o + H * O * isz_w + O * 4 + B * O * 4,
    )
    out_flat = pl.pallas_call(
        _output_kernel,
        out_shape=jax.ShapeDtypeStruct((B, O), jnp.float32),
        grid_spec=pltpu.PrefetchScalarGridSpec(
            num_scalar_prefetch=0,
            grid=(n_o, n_hr),                                  # reduction axis (H) last
            in_specs=[
                pl.BlockSpec((B, th_red), lambda j, k: (0, k)),   # g H-tile
                pl.BlockSpec((th_red, to), lambda j, k: (k, j)),  # w2 (H, O) tile, streamed
                pl.BlockSpec((1, to), lambda j, k: (0, j)),       # b2 (fetched once per j)
            ],
            out_specs=pl.BlockSpec((B, to), lambda j, k: (0, j)),  # same block over k -> accumulate
        ),
        compiler_params=pltpu.CompilerParams(
            dimension_semantics=("parallel", "arbitrary"),
            vmem_limit_bytes=vmem_limit,
        ),
        cost_estimate=cost_b,
    )(g, w2c, b2_2d)

    return out_flat.reshape(B, out_ch, out_h, out_w)


# ----------------------------------------------------------------------------
# Pure-JAX reference + init (PyTorch-style defaults)
# ----------------------------------------------------------------------------

def generator_reference(x, params, out_ch, out_h, out_w):
    """Pure-JAX reference matching the PyTorch module (training-mode BN, exact GELU)."""
    w1, b1, gamma, beta, w2, b2 = params
    h = x @ w1 + b1
    mean = jnp.mean(h, axis=0, keepdims=True)
    var = jnp.mean((h - mean) ** 2, axis=0, keepdims=True)
    hn = (h - mean) / jnp.sqrt(var + 1e-5) * gamma + beta
    g = 0.5 * hn * (1.0 + lax.erf(hn / math.sqrt(2.0)))
    out = jnp.tanh(g @ w2 + b2)
    return out.reshape(x.shape[0], out_ch, out_h, out_w)


def init_params(key, latent_dim, hidden_dim, out_dim):
    """Mimics PyTorch nn.Linear default init (U(-1/sqrt(fan_in), 1/sqrt(fan_in)))
    and BatchNorm1d default (gamma=1, beta=0)."""
    k1, k2, k3, k4 = jax.random.split(key, 4)
    bound1 = 1.0 / math.sqrt(latent_dim)
    bound2 = 1.0 / math.sqrt(hidden_dim)
    w1 = jax.random.uniform(k1, (latent_dim, hidden_dim), jnp.float32, -bound1, bound1)
    b1 = jax.random.uniform(k2, (hidden_dim,), jnp.float32, -bound1, bound1)
    gamma = jnp.ones((hidden_dim,), jnp.float32)
    beta = jnp.zeros((hidden_dim,), jnp.float32)
    w2 = jax.random.uniform(k3, (hidden_dim, out_dim), jnp.float32, -bound2, bound2)
    b2 = jax.random.uniform(k4, (out_dim,), jnp.float32, -bound2, bound2)
    return (w1, b1, gamma, beta, w2, b2)


if __name__ == "__main__":
    # Small shapes consistent with the module: latent_dim=32, mult=4 -> hidden=128,
    # out_ch=1, out_h=8, out_w=16 -> flat output dim 128 (lane-dense).
    B = 8
    latent_dim = 32
    mult = 4
    hidden_dim = latent_dim * mult
    out_ch, out_h, out_w = 1, 8, 16
    out_dim = out_ch * out_h * out_w

    key = jax.random.PRNGKey(0)
    kx, kp = jax.random.split(key)
    x = jax.random.normal(kx, (B, latent_dim), jnp.float32)
    params = init_params(kp, latent_dim, hidden_dim, out_dim)

    out = generator_forward(x, params, out_ch, out_h, out_w)
    out = jax.block_until_ready(out)
    assert out.shape == (B, out_ch, out_h, out_w)
    assert bool(jnp.all(jnp.isfinite(out)))

    ref = generator_reference(x, params, out_ch, out_h, out_w)
    assert bool(jnp.allclose(out, ref, rtol=1e-4, atol=1e-4)), "mismatch vs pure-JAX reference"

    print("KERNEL_OK")
</pallas_src>

<mosaic_0001>
module attributes {stable_mosaic.version = 11 : i64} {
  func.func @_hidden_kernel(%arg0: i32, %arg1: memref<8x32xf32, #tpu.memory_space<vmem>>, %arg2: memref<32x128xf32, #tpu.memory_space<vmem>>, %arg3: memref<1x128xf32, #tpu.memory_space<vmem>>, %arg4: memref<1x128xf32, #tpu.memory_space<vmem>>, %arg5: memref<1x128xf32, #tpu.memory_space<vmem>>, %arg6: memref<8x128xf32, #tpu.memory_space<vmem>>) attributes {dimension_semantics = [#tpu.dimension_semantics<parallel>], iteration_bounds = array<i64: 1>, scalar_prefetch = 0 : i64, scratch_operands = 0 : i64, tpu.core_type = #tpu.core_type<tc>, window_params = [{pipeline_mode = #tpu.pipeline_mode<synchronous>, transform_indices = @transform_0, window_bounds = array<i64: 8, 32>}, {transform_indices = @transform_1, window_bounds = array<i64: 32, 128>}, {transform_indices = @transform_2, window_bounds = array<i64: 1, 128>}, {transform_indices = @transform_3, window_bounds = array<i64: 1, 128>}, {transform_indices = @transform_4, window_bounds = array<i64: 1, 128>}, {transform_indices = @transform_5, window_bounds = array<i64: 8, 128>}]} {
    %c0 = arith.constant 0 : index
    %c0_0 = arith.constant 0 : index
    %0 = vector.load %arg1[%c0, %c0_0] : memref<8x32xf32, #tpu.memory_space<vmem>>, vector<8x32xf32>
    %c0_1 = arith.constant 0 : index
    %c0_2 = arith.constant 0 : index
    %1 = vector.load %arg2[%c0_1, %c0_2] : memref<32x128xf32, #tpu.memory_space<vmem>>, vector<32x128xf32>
    %cst = arith.constant dense<0.000000e+00> : vector<8x128xf32>
    %2 = tpu.matmul %0, %1, %cst {dimension_numbers = #tpu.dot_dimension_numbers<[1], [0], [0], [1], [0, 0, 1, 1], [], []>} : vector<8x32xf32>, vector<32x128xf32>, vector<8x128xf32> -> vector<8x128xf32>
    %c0_3 = arith.constant 0 : index
    %c0_4 = arith.constant 0 : index
    %3 = vector.load %arg3[%c0_3, %c0_4] : memref<1x128xf32, #tpu.memory_space<vmem>>, vector<1x128xf32>
    %4 = vector.broadcast %3 : vector<1x128xf32> to vector<8x128xf32>
    %5 = arith.addf %2, %4 : vector<8x128xf32>
    %cst_5 = arith.constant dense<0.000000e+00> : vector<128xf32>
    %6 = vector.multi_reduction <add>, %5, %cst_5 [0] : vector<8x128xf32> to vector<128xf32>
    %7 = vector.shape_cast %6 : vector<128xf32> to vector<1x128xf32>
    %cst_6 = arith.constant 8.000000e+00 : f32
    %8 = vector.broadcast %cst_6 : f32 to vector<1x128xf32>
    %9 = arith.divf %7, %8 : vector<1x128xf32>
    %10 = vector.broadcast %9 : vector<1x128xf32> to vector<8x128xf32>
    %11 = arith.subf %5, %10 : vector<8x128xf32>
    %12 = vector.broadcast %9 : vector<1x128xf32> to vector<8x128xf32>
    %13 = arith.subf %5, %12 : vector<8x128xf32>
    %14 = arith.mulf %11, %13 : vector<8x128xf32>
    %cst_7 = arith.constant dense<0.000000e+00> : vector<128xf32>
    %15 = vector.multi_reduction <add>, %14, %cst_7 [0] : vector<8x128xf32> to vector<128xf32>
    %16 = vector.shape_cast %15 : vector<128xf32> to vector<1x128xf32>
    %cst_8 = arith.constant 8.000000e+00 : f32
    %17 = vector.broadcast %cst_8 : f32 to vector<1x128xf32>
    %18 = arith.divf %16, %17 : vector<1x128xf32>
    %19 = vector.broadcast %9 : vector<1x128xf32> to vector<8x128xf32>
    %20 = arith.subf %5, %19 : vector<8x128xf32>
    %cst_9 = arith.constant 9.99999974E-6 : f32
    %21 = vector.broadcast %cst_9 : f32 to vector<1x128xf32>
    %22 = arith.addf %18, %21 : vector<1x128xf32>
    %23 = math.rsqrt %22 : vector<1x128xf32>
    %24 = vector.broadcast %23 : vector<1x128xf32> to vector<8x128xf32>
    %25 = arith.mulf %20, %24 : vector<8x128xf32>
    %c0_10 = arith.constant 0 : index
    %c0_11 = arith.constant 0 : index
    %26 = vector.load %arg4[%c0_10, %c0_11] : memref<1x128xf32, #tpu.memory_space<vmem>>, vector<1x128xf32>
    %27 = vector.broadcast %26 : vector<1x128xf32> to vector<8x128xf32>
    %28 = arith.mulf %25, %27 : vector<8x128xf32>
    %c0_12 = arith.constant 0 : index
    %c0_13 = arith.constant 0 : index
    %29 = vector.load %arg5[%c0_12, %c0_13] : memref<1x128xf32, #tpu.memory_space<vmem>>, vector<1x128xf32>
    %30 = vector.broadcast %29 : vector<1x128xf32> to vector<8x128xf32>
    %31 = arith.addf %28, %30 : vector<8x128xf32>
    %cst_14 = arith.constant 5.000000e-01 : f32
    %32 = vector.broadcast %cst_14 : f32 to vector<8x128xf32>
    %33 = arith.mulf %32, %31 : vector<8x128xf32>
    %cst_15 = arith.constant 0.707106769 : f32
    %34 = vector.broadcast %cst_15 : f32 to vector<8x128xf32>
    %35 = arith.mulf %31, %34 : vector<8x128xf32>
    %36 = math.erf %35 : vector<8x128xf32>
    %cst_16 = arith.constant 1.000000e+00 : f32
    %37 = vector.broadcast %cst_16 : f32 to vector<8x128xf32>
    %38 = arith.addf %37, %36 : vector<8x128xf32>
    %39 = arith.mulf %33, %38 : vector<8x128xf32>
    %c0_17 = arith.constant 0 : index
    %c0_18 = arith.constant 0 : index
    %40 = vector.load %arg6[%c0_17, %c0_18] : memref<8x128xf32, #tpu.memory_space<vmem>>, vector<8x128xf32>
    tpu.vector_store %arg6[%c0_17, %c0_18], %39 {strides = array<i32>} : memref<8x128xf32, #tpu.memory_space<vmem>>, vector<8x128xf32>,
    return
  }
  func.func @transform_0(%arg0: i32) -> (i32, i32) {
    %c0_i32 = arith.constant 0 : i32
    %c0_i32_0 = arith.constant 0 : i32
    %c0_i32_1 = arith.constant 0 : i32
    return %c0_i32, %c0_i32_0 : i32, i32
  }
  func.func @transform_1(%arg0: i32) -> (i32, i32) {
    %c0_i32 = arith.constant 0 : i32
    %c0_i32_0 = arith.constant 0 : i32
    return %c0_i32, %arg0 : i32, i32
  }
  func.func @transform_2(%arg0: i32) -> (i32, i32) {
    %c0_i32 = arith.constant 0 : i32
    %c0_i32_0 = arith.constant 0 : i32
    return %c0_i32, %arg0 : i32, i32
  }
  func.func @transform_3(%arg0: i32) -> (i32, i32) {
    %c0_i32 = arith.constant 0 : i32
    %c0_i32_0 = arith.constant 0 : i32
    return %c0_i32, %arg0 : i32, i32
  }
  func.func @transform_4(%arg0: i32) -> (i32, i32) {
    %c0_i32 = arith.constant 0 : i32
    %c0_i32_0 = arith.constant 0 : i32
    return %c0_i32, %arg0 : i32, i32
  }
  func.func @transform_5(%arg0: i32) -> (i32, i32) {
    %c0_i32 = arith.constant 0 : i32
    %c0_i32_0 = arith.constant 0 : i32
    return %c0_i32, %arg0 : i32, i32
  }
}

</mosaic_0001>

<llo_original>
// kernel: tpu_custom_call.1
$region0: #{tpu_custom_call.1}
  #allocation0 [shape = 'u32[]', space=smem, size = 0x4, offset = 0x4, fixed_abs, tag = 'smem constant byte address 0x4 - core index']
  #allocation1 [shape = 'u32[144,128]{1,0:T(1,128)}', space=vmem, size = 0x12000, scoped, tag = 'internal scratch']
  %s0 = inlined_call_operand.hbm [shape: f32[8,32], index: 0, kind: input, shape index: {}]
  %s1 = inlined_call_operand.hbm [shape: f32[32,128], index: 1, kind: input, shape index: {}]
  %s2 = inlined_call_operand.vmem [shape: f32[1,128], index: 2, kind: input, shape index: {}]
  %s3 = inlined_call_operand.vmem [shape: f32[1,128], index: 3, kind: input, shape index: {}]
  %s4 = inlined_call_operand.vmem [shape: f32[1,128], index: 4, kind: input, shape index: {}]
  %s5 = inlined_call_operand.hbm [shape: f32[8,128], index: 5, kind: output, shape index: {}]
  %s6 = sld [smem:[#allocation0]]
  $region38: #{tpu_custom_call.1} parent=0
    _
  %s8 = ssub.s32 1, %s6
  %s9 = scalar_select 0, %s8, %s6
  $region1: #{tpu_custom_call.1} parent=0
    #allocation2 [shape = 'u8[4096]{0}', space=vmem, size = 0x1000, scoped, tag = 'input window, operand 0, single buffered']
    #allocation3 [shape = 's32[1]{0}', space=sflag, size = 0x4, scoped, tag = 'scoped memory for tpu_custom_call.1']
    #allocation4 [shape = 's32[1]{0}', space=sflag, size = 0x4, scoped, tag = 'scoped memory for tpu_custom_call.1']
    #allocation5 [shape = 'u8[16384]{0}', space=vmem, size = 0x4000, scoped, tag = 'input window, operand 1, single buffered']
    #allocation6 [shape = 's32[1]{0}', space=sflag, size = 0x4, scoped, tag = 'scoped memory for tpu_custom_call.1']
    #allocation7 [shape = 'u8[4096]{0}', space=vmem, size = 0x1000, scoped, tag = 'output window, operand 0, single buffered']
    %10 = vsyncpa [#allocation3], 0
    %11 = vsyncpa [#allocation6], 0
    %12 = vsyncpa [#allocation4], 0
    // Predicated region
    $region2: #{tpu_custom_call.1} parent=1 // pred_check
      _
    $region3: #{tpu_custom_call.1} parent=1 // pred_check_branch
      %14 = sbr.rel (0) target = $region5
    $region4: #{tpu_custom_call.1} parent=1 // pred_region
      %s16 = ssub.s32 128, 128
      %17 = vsyncadd [#allocation3], %s16
      %s19 = sshll.u32 [#allocation2], 4
      %s20 = int_to_ptr.vmem [resolvable:$true] %s19
      %22 = dma.hbm_to_vmem [thread:$0]  %s0, 128, %s20, [#allocation3]
    $region5: #{tpu_custom_call.1} parent=1 // pred_fallthru
      _
    // Predicated region
    $region6: #{tpu_custom_call.1} parent=1 // pred_check
      _
    $region7: #{tpu_custom_call.1} parent=1 // pred_check_branch
      %24 = sbr.rel (0) target = $region9
    $region8: #{tpu_custom_call.1} parent=1 // pred_region
      %s26 = ssub.s32 512, 512
      %27 = vsyncadd [#allocation6], %s26
      %s28 = sshll.u32 [#allocation5], 4
      %s29 = int_to_ptr.vmem [resolvable:$true] %s28
      %34 = dma.hbm_to_vmem [thread:$0]  %s1, 512, %s29, [#allocation6], 128, 128, 8
    $region9: #{tpu_custom_call.1} parent=1 // pred_fallthru
      _
    // Predicated region
    $region10: #{tpu_custom_call.1} parent=1 // pred_check
      _
    $region11: #{tpu_custom_call.1} parent=1 // pred_check_branch
      %36 = sbr.rel (0) target = $region13
    $region12: #{tpu_custom_call.1} parent=1 // pred_region
      _
    $region13: #{tpu_custom_call.1} parent=1 // pred_fallthru
      _
    // Predicated region
    $region14: #{tpu_custom_call.1} parent=1 // pred_check
      _
    $region15: #{tpu_custom_call.1} parent=1 // pred_check_branch
      %38 = sbr.rel (0) target = $region17
    $region16: #{tpu_custom_call.1} parent=1 // pred_region
      _
    $region17: #{tpu_custom_call.1} parent=1 // pred_fallthru
      _
    // Predicated region
    $region18: #{tpu_custom_call.1} parent=1 // pred_check
      _
    $region19: #{tpu_custom_call.1} parent=1 // pred_check_branch
      %40 = sbr.rel (0) target = $region21
    $region20: #{tpu_custom_call.1} parent=1 // pred_region
      _
    $region21: #{tpu_custom_call.1} parent=1 // pred_fallthru
      _
    // Predicated region
    $region22: #{tpu_custom_call.1} parent=1 // pred_check
      _
    $region23: #{tpu_custom_call.1} parent=1 // pred_check_branch
      %42 = sbr.rel (0) target = $region25
    $region24: #{tpu_custom_call.1} parent=1 // pred_region
      %43 = dma.done [#allocation3], 128
    $region25: #{tpu_custom_call.1} parent=1 // pred_fallthru
      _
    // Predicated region
    $region26: #{tpu_custom_call.1} parent=1 // pred_check
      _
    $region27: #{tpu_custom_call.1} parent=1 // pred_check_branch
      %45 = sbr.rel (0) target = $region29
    $region28: #{tpu_custom_call.1} parent=1 // pred_region
      %46 = dma.done [#allocation6], 512
    $region29: #{tpu_custom_call.1} parent=1 // pred_fallthru
      _
    %v47 = vld [vmem:[#allocation2] sm:$0xff]
    %v48 = vld [vmem:[#allocation5] sm:$0xff]
    %v49 = vld [vmem:[#allocation5 + $0x8] sm:$0xff]
    %v50 = vld [vmem:[#allocation5 + $0x10] sm:$0xff]
    %v51 = vld [vmem:[#allocation5 + $0x18] sm:$0xff]
    %v52 = vld [vmem:[%s2] sm:$0x1]
    %v54 = vlaneseq
    %v55 = vshrl.u32 %v54, 7
    %v56 = vsub.s32 0, %v55
    %v57 = vrot.slane %v52, %v56
    %vm59 = vcmask 261120
    %v61 = vsel %vm59, %v47, 0
    %63 = vmatprep.subr.mxu0 0.0
    %64 = vmatpush1.msra.mxu0 %v48
    %65 = vmatprep.subr.mxu0 0.0
    %66 = vmatpush1.msra.mxu0 %v49
    %67 = vmatprep.subr.mxu0 0.0
    %68 = vmatpush1.msra.mxu0 %v50
    %69 = vmatprep.subr.mxu0 0.0
    %70 = vmatpush1.msra.mxu0 %v51
    %71 = vmatprep.subr.mxu0 0.0
    %72 = vmatpush1.msra.mxu0 0.0
    %73 = vmatprep.subr.mxu0 0.0
    %74 = vmatpush1.msra.mxu0 0.0
    %75 = vmatprep.subr.mxu0 0.0
    %76 = vmatpush1.msra.mxu0 0.0
    %77 = vmatprep.subr.mxu0 0.0
    %78 = vmatpush1.msra.mxu0 0.0
    %79 = vmatprep.subr.mxu0 0.0
    %80 = vmatpush1.msra.mxu0 0.0
    %81 = vmatprep.subr.mxu0 0.0
    %82 = vmatpush1.msra.mxu0 0.0
    %83 = vmatprep.subr.mxu0 0.0
    %84 = vmatpush1.msra.mxu0 0.0
    %85 = vmatprep.subr.mxu0 0.0
    %86 = vmatpush1.msra.mxu0 0.0
    %87 = vmatprep.subr.mxu0 0.0
    %88 = vmatpush1.msra.mxu0 0.0
    %89 = vmatprep.subr.mxu0 0.0
    %90 = vmatpush1.msra.mxu0 0.0
    %91 = vmatprep.subr.mxu0 0.0
    %92 = vmatpush1.msra.mxu0 0.0
    %93 = vmatprep.subr.mxu0 0.0
    %94 = vmatpush1.msra.mxu0 0.0
    %95 = vmatprep.subr.mxu0 0.0
    %96 = vmatpush1.msra.mxu0 0.0
    %97 = vmatprep.subr.mxu0 0.0
    %98 = vmatpush1.msra.mxu0 0.0
    %99 = vmatprep.subr.mxu0 0.0
    %100 = vmatpush1.msra.mxu0 0.0
    %101 = vmatprep.subr.mxu0 0.0
    %102 = vmatpush1.msra.mxu0 0.0
    %103 = vmatprep.subr.mxu0 0.0
    %104 = vmatpush1.msra.mxu0 0.0
    %105 = vmatprep.subr.mxu0 0.0
    %106 = vmatpush1.msra.mxu0 0.0
    %107 = vmatprep.subr.mxu0 0.0
    %108 = vmatpush1.msra.mxu0 0.0
    %109 = vmatprep.subr.mxu0 0.0
    %110 = vmatpush1.msra.mxu0 0.0
    %111 = vmatprep.subr.mxu0 0.0
    %112 = vmatpush1.msra.mxu0 0.0
    %113 = vmatprep.subr.mxu0 0.0
    %114 = vmatpush1.msra.mxu0 0.0
    %115 = vmatprep.subr.mxu0 0.0
    %116 = vmatpush1.msra.mxu0 0.0
    %117 = vmatprep.subr.mxu0 0.0
    %118 = vmatpush1.msra.mxu0 0.0
    %119 = vmatprep.subr.mxu0 0.0
    %120 = vmatpush1.msra.mxu0 0.0
    %121 = vmatprep.subr.mxu0 0.0
    %122 = vmatpush1.msra.mxu0 0.0
    %123 = vmatprep.subr.mxu0 0.0
    %124 = vmatpush1.msra.mxu0 0.0
    %125 = vmatprep.subr.mxu0 0.0
    %126 = vmatpush1.msra.mxu0 0.0
    %127 = vmatprep.mubr.f32.mxu0 0.0
    %128 = vmatmul.mubr.f32.gmra.mrb[0].mxu0 %v61
    %v129 = vpop.f32.mrb[0].mxu0
    %v130 = vadd.f32 %v57, %v129
    %v131 = vpop.f32.mrb[0].mxu0
    %132 = vdwg.mxu0
    %v133 = vrot.slane %v130, 4
    %v134 = vadd.f32 %v130, %v133
    %v135 = vrot.slane %v134, 2
    %v136 = vadd.f32 %v134, %v135
    %v137 = vrot.slane %v136, 1
    %v138 = vadd.f32 %v136, %v137
    %v139 = vrcp.pop 8.0
    %v140 = vmul.f32 %v138, %v139
    %v141 = vsub.f32 %v130, %v140
    %v142 = vmul.f32 %v141, %v141
    %v143 = vrot.slane %v142, 4
    %v144 = vadd.f32 %v142, %v143
    %v145 = vrot.slane %v144, 2
    %v146 = vadd.f32 %v144, %v145
    %v147 = vrot.slane %v146, 1
    %v148 = vadd.f32 %v146, %v147
    %v149 = vmul.f32 %v148, %v139
    %v150 = vadd.f32 %v149, 1e-05
    %v151 = vrsqrt.pop %v150
    %v152 = vmul.f32 %v141, %v151
    %v153 = vld [vmem:[%s3] sm:$0x1]
    %v155 = vlaneseq
    %v156 = vshrl.u32 %v155, 7
    %v157 = vsub.s32 0, %v156
    %v158 = vrot.slane %v153, %v157
    %v160 = vmul.f32 %v152, %v158
    %v161 = vld [vmem:[%s4] sm:$0x1]
    %v163 = vlaneseq
    %v164 = vshrl.u32 %v163, 7
    %v165 = vsub.s32 0, %v164
    %v166 = vrot.slane %v161, %v165
    %v168 = vadd.f32 %v160, %v166
    %v169 = vmul.f32 %v168, 0.5
    %v170 = vmul.f32 %v168, 0.70710677
    %v171 = verf.f32.pop %v170
    %v172 = vadd.f32 %v171, 1.0
    %v173 = vmul.f32 %v169, %v172
    %174 = vst [vmem:[#allocation7] sm:$0xff] %v173
    // Predicated region
    $region30: #{tpu_custom_call.1} parent=1 // pred_check
      _
    $region31: #{tpu_custom_call.1} parent=1 // pred_check_branch
      %176 = sbr.rel (0) target = $region33
    $region32: #{tpu_custom_call.1} parent=1 // pred_region
      %s178 = ssub.s32 128, 128
      %179 = vsyncadd [#allocation4], %s178
      %s181 = sshll.u32 [#allocation7], 4
      %s182 = int_to_ptr.vmem [resolvable:$true] %s181
      %184 = dma.vmem_to_hbm [thread:$0]  %s182, 128, %s5, [#allocation4]
    $region33: #{tpu_custom_call.1} parent=1 // pred_fallthru
      _
    // Predicated region
    $region34: #{tpu_custom_call.1} parent=1 // pred_check
      _
    $region35: #{tpu_custom_call.1} parent=1 // pred_check_branch
      %186 = sbr.rel (0) target = $region37
    $region36: #{tpu_custom_call.1} parent=1 // pred_region
      %187 = dma.done [#allocation4], 128
    $region37: #{tpu_custom_call.1} parent=1 // pred_fallthru
      _
    %188 = vsyncpa [#allocation3], 1
    %189 = vsyncpa [#allocation6], 1
    %190 = vsyncpa [#allocation4], 1

</llo_original>
